<compile_context>
chip_gen: v6e
topology: v6e:2x2x1
jax: 0.10.0
libtpu: 0.0.40
codegen_flags: <defaults>
</compile_context>

<pallas_src>
import functools
import numpy as np
import jax
import jax.numpy as jnp
from jax.experimental import pallas as pl
from jax.experimental.pallas import tpu as pltpu

# ---- module hyper-parameters (consistent with SharedGroupMLP configs) -------
GS = 8         # SharedGroupMLP group_size
H = 32         # shared MLP hidden dim
OG = 8         # shared MLP output dim per group

F32 = jnp.float32


# ----------------------------------------------------------------------------
# Kernel
# ----------------------------------------------------------------------------
def _analogy_kernel(x_ref, w1_ref, w2_ref, b1_ref, b2_ref, rules_ref, mean_ref):
    """Per grid step:
       x_ref:     (RB, 3e)  row i = [x_i0 | x_i1 | x_i2] on the lane axis
       w1_ref:    (2e, G*H) stacked block-diagonal layer-1 weight
       w2_ref:    (G*H, G*OG) block-diagonal layer-2 weight
       b1_ref:    (1, G*H)   tiled bias
       b2_ref:    (1, G*OG)  tiled bias
       rules_ref: (RB, G*OG)
       mean_ref:  (RB//2, G*OG)
    """
    e = x_ref.shape[1] // 3

    # [d21 | d32] = [x1 | x2] - [x0 | x1]: two contiguous lane slices, one VPU
    # subtract, no concat.  (The offset-e slice is not 128-lane aligned, so
    # Mosaic inserts a lane rotate for it -- one XLU pass per vreg.)
    cat = x_ref[:, e:3 * e] - x_ref[:, 0:2 * e]                    # (RB, 2e)

    # Shared group MLP applied to all groups at once via block-diagonal
    # weights: one fused K=2e dot, ReLU, one K=G*H dot.
    h = (jnp.dot(cat, w1_ref[...], preferred_element_type=jnp.float32)
         + b1_ref[...])                                            # (RB, G*H)
    h = jnp.maximum(h, 0.0)
    rules = (jnp.dot(h, w2_ref[...], preferred_element_type=jnp.float32)
             + b2_ref[...])                                        # (RB, G*OG)

    rules_ref[...] = rules.astype(rules_ref.dtype)                 # single store

    # mean over the two rules of each original batch element: strided even/odd
    # sublane reads of the just-written tile + one VPU add (no per-row unroll).
    half = mean_ref.shape[0]
    even = rules_ref[pl.ds(0, half, 2), :]
    odd = rules_ref[pl.ds(1, half, 2), :]
    mean_ref[...] = (0.5 * (even + odd)).astype(mean_ref.dtype)


# ----------------------------------------------------------------------------
# Parameter plumbing (done ONCE, outside the hot path)
# ----------------------------------------------------------------------------
def prepare_params(w1, b1, w2, b2, e):
    """Expand the shared (2*GS,H)/(H,OG) MLP weights to block-diagonal form so
    one matmul applies the shared MLP to every group.  Call once at init."""
    g = e // GS
    eye_g = jnp.eye(g, dtype=F32)
    w1a = jnp.kron(eye_g, w1[:GS, :].astype(F32))         # (e, g*H)  (d21 half)
    w1b = jnp.kron(eye_g, w1[GS:2 * GS, :].astype(F32))   # (e, g*H)  (d32 half)
    w1_bd = jnp.concatenate([w1a, w1b], axis=0)           # (2e, g*H) stacked
    w2_bd = jnp.kron(eye_g, w2.astype(F32))               # (g*H, g*OG)
    b1_t = jnp.tile(b1.reshape(1, -1).astype(F32), (1, g))   # (1, g*H)
    b2_t = jnp.tile(b2.reshape(1, -1).astype(F32), (1, g))   # (1, g*OG)
    return w1_bd, w2_bd, b1_t, b2_t


def _pick_row_block(rows):
    """Largest power-of-two-ish row block (multiple of 16) that divides `rows`;
    fall back to a single full block for tiny / odd batches."""
    if rows % 16 != 0:
        return rows
    for cand in (2048, 1024, 512, 256, 128, 64, 32, 16):
        if rows % cand == 0:
            return cand
    return rows


# ----------------------------------------------------------------------------
# Forward wrapper
# ----------------------------------------------------------------------------
def constrative_speaker_analogy(x, params, row_block=None):
    """x: (b, 6, e) float32; params from prepare_params.
    Returns (mean (b, G*OG), rules (b, 2, G*OG))."""
    w1_bd, w2_bd, b1_t, b2_t = params
    b, n, e = x.shape
    assert n == 6 and e % GS == 0
    g = e // GS
    d = g * OG
    gh = g * H
    rows = 2 * b

    # Pure view: (b, 6, e) -> (2b, 3e). No transpose, no data movement.
    x2d = x.reshape(rows, 3 * e).astype(F32)

    if row_block is None:
        row_block = _pick_row_block(rows)
    assert rows % row_block == 0 and row_block % 2 == 0
    grid = (rows // row_block,)

    flops = 2 * rows * (2 * e * gh + gh * d)
    bytes_accessed = 4 * (rows * 3 * e + rows * d + (rows // 2) * d
                          + 2 * e * gh + gh * d + gh + d)

    rules_flat, mean = pl.pallas_call(
        _analogy_kernel,
        out_shape=(jax.ShapeDtypeStruct((rows, d), F32),
                   jax.ShapeDtypeStruct((b, d), F32)),
        grid=grid,
        in_specs=[
            pl.BlockSpec((row_block, 3 * e), lambda i: (i, 0)),   # streamed
            pl.BlockSpec((2 * e, gh), lambda i: (0, 0)),          # resident
            pl.BlockSpec((gh, d), lambda i: (0, 0)),              # resident
            pl.BlockSpec((1, gh), lambda i: (0, 0)),              # resident
            pl.BlockSpec((1, d), lambda i: (0, 0)),               # resident
        ],
        out_specs=(
            pl.BlockSpec((row_block, d), lambda i: (i, 0)),
            pl.BlockSpec((row_block // 2, d), lambda i: (i, 0)),
        ),
        compiler_params=pltpu.CompilerParams(
            dimension_semantics=("parallel",)),
        cost_estimate=pl.CostEstimate(flops=flops, transcendentals=0,
                                      bytes_accessed=bytes_accessed),
    )(x2d, w1_bd, w2_bd, b1_t, b2_t)

    return mean, rules_flat.reshape(b, 2, d)


# ----------------------------------------------------------------------------
# Pure-JAX reference mirroring the PyTorch forward
# ----------------------------------------------------------------------------
def _reference(x, w1, b1, w2, b2):
    b, _, e = x.shape
    g = e // GS
    xr = x.reshape(2 * b, 3, e)
    d21 = xr[:, 1, :] - xr[:, 0, :]
    d32 = xr[:, 2, :] - xr[:, 1, :]
    stacked = jnp.stack([d21, d32], axis=1)                   # (2b, 2, e)
    groups = stacked.reshape(2 * b, 2, g, GS)
    groups = jnp.transpose(groups, (0, 2, 1, 3)).reshape(2 * b, g, 2 * GS)
    h = jnp.maximum(groups @ w1 + b1.reshape(1, 1, -1), 0.0)  # shared MLP
    o = h @ w2 + b2.reshape(1, 1, -1)                         # (2b, g, OG)
    rules = o.reshape(b, 2, g * OG)
    return rules.mean(axis=1), rules


if __name__ == "__main__":
    key = jax.random.PRNGKey(0)
    kx, k1, k2, k3, k4, kx2 = jax.random.split(key, 6)

    E = 32  # embedding size e

    # Deterministic synthetic parameters (x @ W convention; a torch nn.Linear
    # weight would need a transpose when porting real checkpoints).
    w1 = jax.random.normal(k1, (2 * GS, H), F32) * 0.1
    b1 = jax.random.normal(k2, (1, H), F32) * 0.1
    w2 = jax.random.normal(k3, (H, OG), F32) * 0.1
    b2 = jax.random.normal(k4, (1, OG), F32) * 0.1

    params = prepare_params(w1, b1, w2, b2, E)   # hoisted out of the hot path
    fwd = jax.jit(constrative_speaker_analogy, static_argnames=("row_block",))

    # --- small shape consistent with the module (b=2) -----------------------
    x_small = jax.random.normal(kx, (2, 6, E), F32)
    mean_s, rules_s = fwd(x_small, params)
    jax.block_until_ready((mean_s, rules_s))
    mean_ref_s, rules_ref_s = _reference(x_small, w1, b1, w2, b2)
    np.testing.assert_allclose(np.asarray(mean_s), np.asarray(mean_ref_s),
                               rtol=1e-5, atol=1e-5)
    np.testing.assert_allclose(np.asarray(rules_s), np.asarray(rules_ref_s),
                               rtol=1e-5, atol=1e-5)

    # --- larger batch: exercises the multi-step row grid (rows=128, RB=64) ---
    x_big = jax.random.normal(kx2, (64, 6, E), F32)
    mean_b, rules_b = fwd(x_big, params, row_block=64)
    jax.block_until_ready((mean_b, rules_b))
    mean_ref_b, rules_ref_b = _reference(x_big, w1, b1, w2, b2)
    np.testing.assert_allclose(np.asarray(mean_b), np.asarray(mean_ref_b),
                               rtol=1e-5, atol=1e-5)
    np.testing.assert_allclose(np.asarray(rules_b), np.asarray(rules_ref_b),
                               rtol=1e-5, atol=1e-5)

    print("KERNEL_OK")
</pallas_src>

<mosaic_0001>
module attributes {stable_mosaic.version = 11 : i64} {
  func.func @_analogy_kernel(%arg0: i32, %arg1: memref<4x96xf32, #tpu.memory_space<vmem>>, %arg2: memref<64x128xf32, #tpu.memory_space<vmem>>, %arg3: memref<128x32xf32, #tpu.memory_space<vmem>>, %arg4: memref<1x128xf32, #tpu.memory_space<vmem>>, %arg5: memref<1x32xf32, #tpu.memory_space<vmem>>, %arg6: memref<4x32xf32, #tpu.memory_space<vmem>>, %arg7: memref<2x32xf32, #tpu.memory_space<vmem>>) attributes {dimension_semantics = [#tpu.dimension_semantics<parallel>], iteration_bounds = array<i64: 1>, scalar_prefetch = 0 : i64, scratch_operands = 0 : i64, tpu.core_type = #tpu.core_type<tc>, window_params = [{transform_indices = @transform_0, window_bounds = array<i64: 4, 96>}, {pipeline_mode = #tpu.pipeline_mode<synchronous>, transform_indices = @transform_1, window_bounds = array<i64: 64, 128>}, {pipeline_mode = #tpu.pipeline_mode<synchronous>, transform_indices = @transform_2, window_bounds = array<i64: 128, 32>}, {pipeline_mode = #tpu.pipeline_mode<synchronous>, transform_indices = @transform_3, window_bounds = array<i64: 1, 128>}, {pipeline_mode = #tpu.pipeline_mode<synchronous>, transform_indices = @transform_4, window_bounds = array<i64: 1, 32>}, {transform_indices = @transform_5, window_bounds = array<i64: 4, 32>}, {transform_indices = @transform_6, window_bounds = array<i64: 2, 32>}]} {
    %c0 = arith.constant 0 : index
    %c32 = arith.constant 32 : index
    %0 = vector.load %arg1[%c0, %c32] : memref<4x96xf32, #tpu.memory_space<vmem>>, vector<4x64xf32>
    %c0_0 = arith.constant 0 : index
    %c0_1 = arith.constant 0 : index
    %1 = vector.load %arg1[%c0_0, %c0_1] : memref<4x96xf32, #tpu.memory_space<vmem>>, vector<4x64xf32>
    %2 = arith.subf %0, %1 : vector<4x64xf32>
    %c0_2 = arith.constant 0 : index
    %c0_3 = arith.constant 0 : index
    %3 = vector.load %arg2[%c0_2, %c0_3] : memref<64x128xf32, #tpu.memory_space<vmem>>, vector<64x128xf32>
    %cst = arith.constant dense<0.000000e+00> : vector<4x128xf32>
    %4 = tpu.matmul %2, %3, %cst {dimension_numbers = #tpu.dot_dimension_numbers<[1], [0], [0], [1], [0, 0, 1, 1], [], []>} : vector<4x64xf32>, vector<64x128xf32>, vector<4x128xf32> -> vector<4x128xf32>
    %c0_4 = arith.constant 0 : index
    %c0_5 = arith.constant 0 : index
    %5 = vector.load %arg4[%c0_4, %c0_5] : memref<1x128xf32, #tpu.memory_space<vmem>>, vector<1x128xf32>
    %6 = vector.broadcast %5 : vector<1x128xf32> to vector<4x128xf32>
    %7 = arith.addf %4, %6 : vector<4x128xf32>
    %cst_6 = arith.constant 0.000000e+00 : f32
    %8 = vector.broadcast %cst_6 : f32 to vector<4x128xf32>
    %9 = arith.maximumf %7, %8 : vector<4x128xf32>
    %c0_7 = arith.constant 0 : index
    %c0_8 = arith.constant 0 : index
    %10 = vector.load %arg3[%c0_7, %c0_8] : memref<128x32xf32, #tpu.memory_space<vmem>>, vector<128x32xf32>
    %cst_9 = arith.constant dense<0.000000e+00> : vector<4x32xf32>
    %11 = tpu.matmul %9, %10, %cst_9 {dimension_numbers = #tpu.dot_dimension_numbers<[1], [0], [0], [1], [0, 0, 1, 1], [], []>} : vector<4x128xf32>, vector<128x32xf32>, vector<4x32xf32> -> vector<4x32xf32>
    %c0_10 = arith.constant 0 : index
    %c0_11 = arith.constant 0 : index
    %12 = vector.load %arg5[%c0_10, %c0_11] : memref<1x32xf32, #tpu.memory_space<vmem>>, vector<1x32xf32>
    %13 = vector.broadcast %12 : vector<1x32xf32> to vector<4x32xf32>
    %14 = arith.addf %11, %13 : vector<4x32xf32>
    %c0_12 = arith.constant 0 : index
    %c0_13 = arith.constant 0 : index
    %15 = vector.load %arg6[%c0_12, %c0_13] : memref<4x32xf32, #tpu.memory_space<vmem>>, vector<4x32xf32>
    tpu.vector_store %arg6[%c0_12, %c0_13], %14 {strides = array<i32>} : memref<4x32xf32, #tpu.memory_space<vmem>>, vector<4x32xf32>,
    %c0_14 = arith.constant 0 : index
    %c0_15 = arith.constant 0 : index
    %16 = tpu.strided_load %arg6[%c0_14, %c0_15] {strides = array<i32: 2, 1>} : memref<4x32xf32, #tpu.memory_space<vmem>>, vector<2x32xf32>
    %c1 = arith.constant 1 : index
    %c0_16 = arith.constant 0 : index
    %17 = tpu.strided_load %arg6[%c1, %c0_16] {strides = array<i32: 2, 1>} : memref<4x32xf32, #tpu.memory_space<vmem>>, vector<2x32xf32>
    %18 = arith.addf %16, %17 : vector<2x32xf32>
    %cst_17 = arith.constant 5.000000e-01 : f32
    %19 = vector.broadcast %cst_17 : f32 to vector<2x32xf32>
    %20 = arith.mulf %19, %18 : vector<2x32xf32>
    %c0_18 = arith.constant 0 : index
    %c0_19 = arith.constant 0 : index
    %21 = vector.load %arg7[%c0_18, %c0_19] : memref<2x32xf32, #tpu.memory_space<vmem>>, vector<2x32xf32>
    tpu.vector_store %arg7[%c0_18, %c0_19], %20 {strides = array<i32>} : memref<2x32xf32, #tpu.memory_space<vmem>>, vector<2x32xf32>,
    return
  }
  func.func @transform_0(%arg0: i32) -> (i32, i32) {
    %c0_i32 = arith.constant 0 : i32
    %c0_i32_0 = arith.constant 0 : i32
    return %arg0, %c0_i32 : i32, i32
  }
  func.func @transform_1(%arg0: i32) -> (i32, i32) {
    %c0_i32 = arith.constant 0 : i32
    %c0_i32_0 = arith.constant 0 : i32
    %c0_i32_1 = arith.constant 0 : i32
    return %c0_i32, %c0_i32_0 : i32, i32
  }
  func.func @transform_2(%arg0: i32) -> (i32, i32) {
    %c0_i32 = arith.constant 0 : i32
    %c0_i32_0 = arith.constant 0 : i32
    %c0_i32_1 = arith.constant 0 : i32
    return %c0_i32, %c0_i32_0 : i32, i32
  }
  func.func @transform_3(%arg0: i32) -> (i32, i32) {
    %c0_i32 = arith.constant 0 : i32
    %c0_i32_0 = arith.constant 0 : i32
    %c0_i32_1 = arith.constant 0 : i32
    return %c0_i32, %c0_i32_0 : i32, i32
  }
  func.func @transform_4(%arg0: i32) -> (i32, i32) {
    %c0_i32 = arith.constant 0 : i32
    %c0_i32_0 = arith.constant 0 : i32
    %c0_i32_1 = arith.constant 0 : i32
    return %c0_i32, %c0_i32_0 : i32, i32
  }
  func.func @transform_5(%arg0: i32) -> (i32, i32) {
    %c0_i32 = arith.constant 0 : i32
    %c0_i32_0 = arith.constant 0 : i32
    return %arg0, %c0_i32 : i32, i32
  }
  func.func @transform_6(%arg0: i32) -> (i32, i32) {
    %c0_i32 = arith.constant 0 : i32
    %c0_i32_0 = arith.constant 0 : i32
    return %arg0, %c0_i32 : i32, i32
  }
}

</mosaic_0001>

<llo_original>
// kernel: constrative_speaker_analogy.1
$region0: #{constrative_speaker_analogy.1}
  #allocation0 [shape = 'u32[]', space=smem, size = 0x4, offset = 0x4, fixed_abs, tag = 'smem constant byte address 0x4 - core index']
  #allocation1 [shape = 'u32[144,128]{1,0:T(1,128)}', space=vmem, size = 0x12000, scoped, tag = 'internal scratch']
  %s0 = inlined_call_operand.vmem [shape: f32[4,96], index: 0, kind: input, shape index: {}]
  %s1 = inlined_call_operand.vmem [shape: f32[64,128], index: 1, kind: input, shape index: {}]
  %s2 = inlined_call_operand.vmem [shape: f32[128,32], index: 2, kind: input, shape index: {}]
  %s3 = inlined_call_operand.vmem [shape: f32[1,128], index: 3, kind: input, shape index: {}]
  %s4 = inlined_call_operand.vmem [shape: f32[1,32], index: 4, kind: input, shape index: {}]
  %s5 = inlined_call_operand.hbm [shape: f32[4,32], index: 5, kind: output, shape index: {0}]
  %s6 = inlined_call_operand.hbm [shape: f32[2,32], index: 6, kind: output, shape index: {1}]
  %7 = xla_tuple %s5, %s6
  %s8 = sld [smem:[#allocation0]]
  $region38: #{constrative_speaker_analogy.1} parent=0
    _
  %s10 = ssub.s32 1, %s8
  %s11 = scalar_select 0, %s10, %s8
  $region1: #{constrative_speaker_analogy.1} parent=0
    #allocation2 [shape = 'u8[2048]{0}', space=vmem, size = 0x800, scoped, tag = 'output window, operand 0, single buffered']
    #allocation3 [shape = 's32[1]{0}', space=sflag, size = 0x4, scoped, tag = 'scoped memory for constrative_speaker_analogy.1']
    #allocation4 [shape = 'u8[1024]{0}', space=vmem, size = 0x400, scoped, tag = 'output window, operand 1, single buffered']
    #allocation5 [shape = 's32[1]{0}', space=sflag, size = 0x4, scoped, tag = 'scoped memory for constrative_speaker_analogy.1']
    %12 = vsyncpa [#allocation3], 0
    %13 = vsyncpa [#allocation5], 0
    // Predicated region
    $region2: #{constrative_speaker_analogy.1} parent=1 // pred_check
      _
    $region3: #{constrative_speaker_analogy.1} parent=1 // pred_check_branch
      %15 = sbr.rel (0) target = $region5
    $region4: #{constrative_speaker_analogy.1} parent=1 // pred_region
      _
    $region5: #{constrative_speaker_analogy.1} parent=1 // pred_fallthru
      _
    // Predicated region
    $region6: #{constrative_speaker_analogy.1} parent=1 // pred_check
      _
    $region7: #{constrative_speaker_analogy.1} parent=1 // pred_check_branch
      %17 = sbr.rel (0) target = $region9
    $region8: #{constrative_speaker_analogy.1} parent=1 // pred_region
      _
    $region9: #{constrative_speaker_analogy.1} parent=1 // pred_fallthru
      _
    // Predicated region
    $region10: #{constrative_speaker_analogy.1} parent=1 // pred_check
      _
    $region11: #{constrative_speaker_analogy.1} parent=1 // pred_check_branch
      %19 = sbr.rel (0) target = $region13
    $region12: #{constrative_speaker_analogy.1} parent=1 // pred_region
      _
    $region13: #{constrative_speaker_analogy.1} parent=1 // pred_fallthru
      _
    // Predicated region
    $region14: #{constrative_speaker_analogy.1} parent=1 // pred_check
      _
    $region15: #{constrative_speaker_analogy.1} parent=1 // pred_check_branch
      %21 = sbr.rel (0) target = $region17
    $region16: #{constrative_speaker_analogy.1} parent=1 // pred_region
      _
    $region17: #{constrative_speaker_analogy.1} parent=1 // pred_fallthru
      _
    // Predicated region
    $region18: #{constrative_speaker_analogy.1} parent=1 // pred_check
      _
    $region19: #{constrative_speaker_analogy.1} parent=1 // pred_check_branch
      %23 = sbr.rel (0) target = $region21
    $region20: #{constrative_speaker_analogy.1} parent=1 // pred_region
      _
    $region21: #{constrative_speaker_analogy.1} parent=1 // pred_fallthru
      _
    %v24 = vld [vmem:[%s0] sm:$0xf]
    %26 = vrot.lane.b32.xlu0 %v24, 32
    %v27 = vpop.permute.xlu0 %26
    %v29 = vsub.f32 %v24, %v27
    %v30 = vld [vmem:[%s1] sm:$0xff]
    %v31 = vld [vmem:[%s1 + $0x8] sm:$0xff]
    %v32 = vld [vmem:[%s1 + $0x10] sm:$0xff]
    %v33 = vld [vmem:[%s1 + $0x18] sm:$0xff]
    %v34 = vld [vmem:[%s1 + $0x20] sm:$0xff]
    %v35 = vld [vmem:[%s1 + $0x28] sm:$0xff]
    %v36 = vld [vmem:[%s1 + $0x30] sm:$0xff]
    %v37 = vld [vmem:[%s1 + $0x38] sm:$0xff]
    %v38 = vld [vmem:[%s3] sm:$0x1]
    %v40 = vlaneseq
    %v41 = vshrl.u32 %v40, 7
    %v42 = vsub.s32 0, %v41
    %v43 = vrot.slane %v38, %v42
    %46 = vrot.lane.b32.xlu0 %v29, 96
    %v47 = vpop.permute.xlu0 %46
    %vm48 = vcmask 523264
    %v49 = vsel %vm48, %v47, 0
    %51 = vmatprep.subr.mxu0 0.0
    %52 = vmatpush1.msra.mxu0 0.0
    %53 = vmatprep.subr.mxu0 0.0
    %54 = vmatpush1.msra.mxu0 0.0
    %55 = vmatprep.subr.mxu0 0.0
    %56 = vmatpush1.msra.mxu0 0.0
    %57 = vmatprep.subr.mxu0 0.0
    %58 = vmatpush1.msra.mxu0 0.0
    %59 = vmatprep.subr.mxu0 0.0
    %60 = vmatpush1.msra.mxu0 0.0
    %61 = vmatprep.subr.mxu0 0.0
    %62 = vmatpush1.msra.mxu0 0.0
    %63 = vmatprep.subr.mxu0 0.0
    %64 = vmatpush1.msra.mxu0 0.0
    %65 = vmatprep.subr.mxu0 0.0
    %66 = vmatpush1.msra.mxu0 0.0
    %67 = vmatprep.subr.mxu0 0.0
    %68 = vmatpush1.msra.mxu0 %v37
    %69 = vmatprep.subr.mxu0 0.0
    %70 = vmatpush1.msra.mxu0 %v36
    %71 = vmatprep.subr.mxu0 0.0
    %72 = vmatpush1.msra.mxu0 %v35
    %73 = vmatprep.subr.mxu0 0.0
    %74 = vmatpush1.msra.mxu0 %v34
    %75 = vmatprep.subr.mxu0 0.0
    %76 = vmatpush1.msra.mxu0 %v33
    %77 = vmatprep.subr.mxu0 0.0
    %78 = vmatpush1.msra.mxu0 %v32
    %79 = vmatprep.subr.mxu0 0.0
    %80 = vmatpush1.msra.mxu0 %v31
    %81 = vmatprep.subr.mxu0 0.0
    %82 = vmatpush1.msra.mxu0 %v30
    %83 = vmatprep.subr.mxu0 0.0
    %84 = vmatpush2.msra.mxu0 0.0
    %85 = vmatprep.subr.mxu0 0.0
    %86 = vmatpush2.msra.mxu0 0.0
    %87 = vmatprep.subr.mxu0 0.0
    %88 = vmatpush2.msra.mxu0 0.0
    %89 = vmatprep.subr.mxu0 0.0
    %90 = vmatpush2.msra.mxu0 0.0
    %91 = vmatprep.subr.mxu0 0.0
    %92 = vmatpush2.msra.mxu0 0.0
    %93 = vmatprep.subr.mxu0 0.0
    %94 = vmatpush2.msra.mxu0 0.0
    %95 = vmatprep.subr.mxu0 0.0
    %96 = vmatpush2.msra.mxu0 0.0
    %97 = vmatprep.subr.mxu0 0.0
    %98 = vmatpush2.msra.mxu0 0.0
    %99 = vmatprep.subr.mxu0 0.0
    %100 = vmatpush2.msra.mxu0 0.0
    %101 = vmatprep.subr.mxu0 0.0
    %102 = vmatpush2.msra.mxu0 0.0
    %103 = vmatprep.subr.mxu0 0.0
    %104 = vmatpush2.msra.mxu0 0.0
    %105 = vmatprep.subr.mxu0 0.0
    %106 = vmatpush2.msra.mxu0 0.0
    %107 = vmatprep.subr.mxu0 0.0
    %108 = vmatpush2.msra.mxu0 0.0
    %109 = vmatprep.subr.mxu0 0.0
    %110 = vmatpush2.msra.mxu0 0.0
    %111 = vmatprep.subr.mxu0 0.0
    %112 = vmatpush2.msra.mxu0 0.0
    %113 = vmatprep.subr.mxu0 0.0
    %114 = vmatpush2.msra.mxu0 0.0
    %115 = vmatprep.mubr.f32.mxu0 0.0
    %116 = vmatmul.mubr.f32.gmra.mxu0 %v49
    %v117 = vpop.f32.mrf.mxu0
    %v118 = vadd.f32 %v43, %v117
    %v119 = vpop.f32.mrf.mxu0
    %120 = vdwg.mxu0
    %v121 = vmax.f32 %v118, 0.0
    %v122 = vld [vmem:[%s2] sm:$0xff]
    %v123 = vld [vmem:[%s2 + $0x8] sm:$0xff]
    %v124 = vld [vmem:[%s2 + $0x10] sm:$0xff]
    %v125 = vld [vmem:[%s2 + $0x18] sm:$0xff]
    %v126 = vld [vmem:[%s2 + $0x20] sm:$0xff]
    %v127 = vld [vmem:[%s2 + $0x28] sm:$0xff]
    %v128 = vld [vmem:[%s2 + $0x30] sm:$0xff]
    %v129 = vld [vmem:[%s2 + $0x38] sm:$0xff]
    %v130 = vld [vmem:[%s2 + $0x40] sm:$0xff]
    %v131 = vld [vmem:[%s2 + $0x48] sm:$0xff]
    %v132 = vld [vmem:[%s2 + $0x50] sm:$0xff]
    %v133 = vld [vmem:[%s2 + $0x58] sm:$0xff]
    %v134 = vld [vmem:[%s2 + $0x60] sm:$0xff]
    %v135 = vld [vmem:[%s2 + $0x68] sm:$0xff]
    %v136 = vld [vmem:[%s2 + $0x70] sm:$0xff]
    %v137 = vld [vmem:[%s2 + $0x78] sm:$0xff]
    %v138 = vld [vmem:[%s4] sm:$0x1]
    %v140 = vlaneseq
    %v141 = vshrl.u32 %v140, 7
    %v142 = vsub.s32 0, %v141
    %v143 = vrot.slane %v138, %v142
    %145 = vmatprep.subr.mxu0 0.0
    %146 = vmatpush1.msra.mxu0 %v137
    %147 = vmatprep.subr.mxu0 0.0
    %148 = vmatpush1.msra.mxu0 %v136
    %149 = vmatprep.subr.mxu0 0.0
    %150 = vmatpush1.msra.mxu0 %v135
    %151 = vmatprep.subr.mxu0 0.0
    %152 = vmatpush1.msra.mxu0 %v134
    %153 = vmatprep.subr.mxu0 0.0
    %154 = vmatpush1.msra.mxu0 %v133
    %155 = vmatprep.subr.mxu0 0.0
    %156 = vmatpush1.msra.mxu0 %v132
    %157 = vmatprep.subr.mxu0 0.0
    %158 = vmatpush1.msra.mxu0 %v131
    %159 = vmatprep.subr.mxu0 0.0
    %160 = vmatpush1.msra.mxu0 %v130
    %161 = vmatprep.subr.mxu0 0.0
    %162 = vmatpush1.msra.mxu0 %v129
    %163 = vmatprep.subr.mxu0 0.0
    %164 = vmatpush1.msra.mxu0 %v128
    %165 = vmatprep.subr.mxu0 0.0
    %166 = vmatpush1.msra.mxu0 %v127
    %167 = vmatprep.subr.mxu0 0.0
    %168 = vmatpush1.msra.mxu0 %v126
    %169 = vmatprep.subr.mxu0 0.0
    %170 = vmatpush1.msra.mxu0 %v125
    %171 = vmatprep.subr.mxu0 0.0
    %172 = vmatpush1.msra.mxu0 %v124
    %173 = vmatprep.subr.mxu0 0.0
    %174 = vmatpush1.msra.mxu0 %v123
    %175 = vmatprep.subr.mxu0 0.0
    %176 = vmatpush1.msra.mxu0 %v122
    %177 = vmatprep.subr.mxu0 0.0
    %178 = vmatpush2.msra.mxu0 0.0
    %179 = vmatprep.subr.mxu0 0.0
    %180 = vmatpush2.msra.mxu0 0.0
    %181 = vmatprep.subr.mxu0 0.0
    %182 = vmatpush2.msra.mxu0 0.0
    %183 = vmatprep.subr.mxu0 0.0
    %184 = vmatpush2.msra.mxu0 0.0
    %185 = vmatprep.subr.mxu0 0.0
    %186 = vmatpush2.msra.mxu0 0.0
    %187 = vmatprep.subr.mxu0 0.0
    %188 = vmatpush2.msra.mxu0 0.0
    %189 = vmatprep.subr.mxu0 0.0
    %190 = vmatpush2.msra.mxu0 0.0
    %191 = vmatprep.subr.mxu0 0.0
    %192 = vmatpush2.msra.mxu0 0.0
    %193 = vmatprep.subr.mxu0 0.0
    %194 = vmatpush2.msra.mxu0 0.0
    %195 = vmatprep.subr.mxu0 0.0
    %196 = vmatpush2.msra.mxu0 0.0
    %197 = vmatprep.subr.mxu0 0.0
    %198 = vmatpush2.msra.mxu0 0.0
    %199 = vmatprep.subr.mxu0 0.0
    %200 = vmatpush2.msra.mxu0 0.0
    %201 = vmatprep.subr.mxu0 0.0
    %202 = vmatpush2.msra.mxu0 0.0
    %203 = vmatprep.subr.mxu0 0.0
    %204 = vmatpush2.msra.mxu0 0.0
    %205 = vmatprep.subr.mxu0 0.0
    %206 = vmatpush2.msra.mxu0 0.0
    %207 = vmatprep.subr.mxu0 0.0
    %208 = vmatpush2.msra.mxu0 0.0
    %209 = vmatprep.mubr.f32.mxu0 0.0
    %210 = vmatmul.mubr.f32.gmra.mxu0 %v121
    %v211 = vpop.f32.mrf.mxu0
    %v212 = vadd.f32 %v143, %v211
    %v213 = vpop.f32.mrf.mxu0
    %214 = vdwg.mxu0
    %vm215 = vcmask 257024
    %216 = vst.msk [vmem:[#allocation2] sm:$0xf] %vm215, %v212
    %v217 = vld [vmem:[#allocation2] ss:$2 sm:$0x3]
    %s218 = scalar_lea.vmem [#allocation2], 1
    %v219 = vld [vmem:[%s218] ss:$2 sm:$0x3]
    %v220 = vadd.f32 %v217, %v219
    %v221 = vmul.f32 %v220, 0.5
    %vm222 = vcmask 254976
    %223 = vst.msk [vmem:[#allocation4] sm:$0x3] %vm222, %v221
    // Predicated region
    $region22: #{constrative_speaker_analogy.1} parent=1 // pred_check
      _
    $region23: #{constrative_speaker_analogy.1} parent=1 // pred_check_branch
      %225 = sbr.rel (0) target = $region25
    $region24: #{constrative_speaker_analogy.1} parent=1 // pred_region
      %s227 = ssub.s32 64, 64
      %228 = vsyncadd [#allocation3], %s227
      %s230 = sshll.u32 [#allocation2], 4
      %s231 = int_to_ptr.vmem [resolvable:$true] %s230
      %233 = dma.vmem_to_hbm [thread:$0]  %s231, 64, %s5, [#allocation3]
    $region25: #{constrative_speaker_analogy.1} parent=1 // pred_fallthru
      _
    // Predicated region
    $region26: #{constrative_speaker_analogy.1} parent=1 // pred_check
      _
    $region27: #{constrative_speaker_analogy.1} parent=1 // pred_check_branch
      %235 = sbr.rel (0) target = $region29
    $region28: #{constrative_speaker_analogy.1} parent=1 // pred_region
      %s237 = ssub.s32 32, 32
      %238 = vsyncadd [#allocation5], %s237
      %s240 = sshll.u32 [#allocation4], 4
      %s241 = int_to_ptr.vmem [resolvable:$true] %s240
      %243 = dma.vmem_to_hbm [thread:$0]  %s241, 32, %s6, [#allocation5]
    $region29: #{constrative_speaker_analogy.1} parent=1 // pred_fallthru
      _
    // Predicated region
    $region30: #{constrative_speaker_analogy.1} parent=1 // pred_check
      _
    $region31: #{constrative_speaker_analogy.1} parent=1 // pred_check_branch
      %245 = sbr.rel (0) target = $region33
    $region32: #{constrative_speaker_analogy.1} parent=1 // pred_region
      %246 = dma.done [#allocation3], 64
    $region33: #{constrative_speaker_analogy.1} parent=1 // pred_fallthru
      _
    // Predicated region
    $region34: #{constrative_speaker_analogy.1} parent=1 // pred_check
      _
    $region35: #{constrative_speaker_analogy.1} parent=1 // pred_check_branch
      %248 = sbr.rel (0) target = $region37
    $region36: #{constrative_speaker_analogy.1} parent=1 // pred_region
      %249 = dma.done [#allocation5], 32
    $region37: #{constrative_speaker_analogy.1} parent=1 // pred_fallthru
      _
    %250 = vsyncpa [#allocation3], 1
    %251 = vsyncpa [#allocation5], 1

</llo_original>
